<compile_context>
chip_gen: v7x
topology: tpu7x:2x2x1
jax: 0.10.0
libtpu: 0.0.40
codegen_flags: <defaults>
</compile_context>

<pallas_src>
import jax
import jax.numpy as jnp
from jax import lax
from jax.experimental import pallas as pl
from jax.experimental.pallas import tpu as pltpu

_LANES = 128
_SUBLANES = 8


def _round_up(n, m):
    return ((n + m - 1) // m) * m


def _choose_tile(B, batch_tile):
    """Batch tile (lane axis of the output block)."""
    if B <= _LANES:
        return B  # single full-dim block (legal: equals the full array dim)
    # Multiple of 128 (lane-dense output stores); cap at cdiv(B,2) rounded up so
    # the grid has >= 2 steps -> both v7x TensorCores are used.
    t = _round_up(pl.cdiv(B, 2), _LANES)
    return max(_LANES, min(batch_tile, t))


def nkn_kernel(x_ref, w1_ref, b1_ref, w2_ref, b2_ref, w3_ref, b3_ref, o_ref):
    cdt = w1_ref.dtype
    # x tile (tile, D_in); cast (if bf16 path) happens here on the VMEM copy,
    # never as a wrapper-side HBM pass.
    x = x_ref[...].astype(cdt)

    # h1 = W1 @ x^T : contract D_in (axis 1 of both) -> (H, tile), f32 MXU acc.
    h1 = lax.dot_general(w1_ref[...], x, (((1,), (1,)), ((), ())),
                         preferred_element_type=jnp.float32)
    h1 = jnp.maximum(h1 + b1_ref[...], 0.0)          # bias + relu, f32, lane-dense

    h2 = jnp.dot(w2_ref[...], h1.astype(cdt),
                 preferred_element_type=jnp.float32)
    h2 = jnp.sin(h2 + b2_ref[...])                   # sin activation, f32, (H, tile)

    o = jnp.dot(w3_ref[...], h2.astype(cdt),
                preferred_element_type=jnp.float32) + b3_ref[...]
    o_ref[...] = o.astype(o_ref.dtype)               # (8, tile): narrow AND lane-dense


def nkn_forward(x, params, *, batch_tile=4096, matmul_dtype=None, out_dtype=None):
    """Fused NKN forward.

    params: PyTorch-layout (w1 (H,Din), b1 (H,), w2 (H,H), b2 (H,), w3 (2,H), b3 (2,)).
    matmul_dtype: None (keep x.dtype) or jnp.bfloat16 for bf16 matmul operands
    (f32 accumulation, f32 elementwise); x itself is cast inside the kernel.
    out_dtype: dtype of the stored output (default x.dtype; pass jnp.bfloat16 to
    halve output writeback on v6e/v7x).
    """
    w1, b1, w2, b2, w3, b3 = params
    B, D_in = x.shape
    H = w1.shape[0]
    D_out = w3.shape[0]
    if out_dtype is None:
        out_dtype = x.dtype

    # Pad output-layer rows (features) to 8 sublanes only -- tiny, one-time.
    D_out_p = _round_up(max(D_out, _SUBLANES), _SUBLANES)
    w3p = jnp.zeros((D_out_p, H), w3.dtype).at[:D_out].set(w3)
    b3p = jnp.zeros((D_out_p, 1), jnp.float32).at[:D_out, 0].set(b3.reshape(-1).astype(jnp.float32))

    # Biases as f32 column vectors (broadcast over the batch/lane axis).
    b1c = b1.reshape(H, 1).astype(jnp.float32)
    b2c = b2.reshape(H, 1).astype(jnp.float32)

    # Matmul-operand dtype: weights are tiny and resident, cast them here;
    # x is cast inside the kernel (no extra HBM pass).
    cdt = matmul_dtype if matmul_dtype is not None else x.dtype
    w1c = w1.astype(cdt)
    w2c = w2.astype(cdt)
    w3c = w3p.astype(cdt)

    tile = _choose_tile(B, batch_tile)
    grid = (pl.cdiv(B, tile),)  # ragged last block handled by Pallas (no jnp.pad)

    # Advisory cost estimate with real (un-padded) bytes.
    flops = 2 * B * (D_in * H + H * H + H * D_out_p)
    bytes_accessed = (
        B * D_in * x.dtype.itemsize
        + B * D_out_p * jnp.dtype(out_dtype).itemsize
        + w1c.size * w1c.dtype.itemsize + b1c.size * b1c.dtype.itemsize
        + w2c.size * w2c.dtype.itemsize + b2c.size * b2c.dtype.itemsize
        + w3c.size * w3c.dtype.itemsize + b3p.size * b3p.dtype.itemsize
    )
    cost = pl.CostEstimate(
        flops=int(flops),
        transcendentals=int(B * H),   # sin
        bytes_accessed=int(bytes_accessed),
    )

    out_t = pl.pallas_call(
        nkn_kernel,
        out_shape=jax.ShapeDtypeStruct((D_out_p, B), out_dtype),
        grid_spec=pltpu.PrefetchScalarGridSpec(
            num_scalar_prefetch=0,
            grid=grid,
            in_specs=[
                # x: tiled over batch (sublane axis of the input block)
                pl.BlockSpec((tile, D_in), lambda i: (i, 0)),
                # weights / biases: full blocks, resident across all grid steps
                pl.BlockSpec((H, D_in), lambda i: (0, 0)),
                pl.BlockSpec((H, 1), lambda i: (0, 0)),
                pl.BlockSpec((H, H), lambda i: (0, 0)),
                pl.BlockSpec((H, 1), lambda i: (0, 0)),
                pl.BlockSpec((D_out_p, H), lambda i: (0, 0)),
                pl.BlockSpec((D_out_p, 1), lambda i: (0, 0)),
            ],
            # output transposed: batch on the lane axis -> narrow, lane-dense stores
            out_specs=pl.BlockSpec((D_out_p, tile), lambda i: (0, i)),
        ),
        compiler_params=pltpu.CompilerParams(
            dimension_semantics=("parallel",),   # shards batch grid across TCs on v7x
        ),
        cost_estimate=cost,
    )(x, w1c, b1c, w2c, b2c, w3c, b3p)

    # (D_out_p, B) -> (B, D_out): tiny slab (8 B/row), layout plumbing only.
    return out_t[:D_out, :].T


def init_params(key, input_dim, hidden_dim=32, out_dim=2):
    """PyTorch nn.Linear-style init: W (out, in), b (out,), U[-1/sqrt(fan_in), +1/sqrt(fan_in)]."""
    ks = jax.random.split(key, 6)

    def linear(kw, kb, fan_in, fan_out):
        bound = 1.0 / jnp.sqrt(fan_in)
        w = jax.random.uniform(kw, (fan_out, fan_in), jnp.float32, -bound, bound)
        b = jax.random.uniform(kb, (fan_out,), jnp.float32, -bound, bound)
        return w, b

    w1, b1 = linear(ks[0], ks[1], input_dim, hidden_dim)
    w2, b2 = linear(ks[2], ks[3], hidden_dim, hidden_dim)
    w3, b3 = linear(ks[4], ks[5], hidden_dim, out_dim)
    return (w1, b1, w2, b2, w3, b3)


def nkn_reference(x, params):
    w1, b1, w2, b2, w3, b3 = params
    h = jnp.maximum(x @ w1.T + b1, 0.0)
    h = jnp.sin(h @ w2.T + b2)
    return h @ w3.T + b3


if __name__ == "__main__":
    key = jax.random.PRNGKey(0)
    k_param, k_x, k_x2 = jax.random.split(key, 3)

    batch, input_dim, hidden_dim = 8, 16, 32
    params = init_params(k_param, input_dim, hidden_dim)

    # Small demo batch (single full-dim block), f32 path.
    x = jax.random.normal(k_x, (batch, input_dim), dtype=jnp.float32)
    out = jax.block_until_ready(nkn_forward(x, params))
    ref = nkn_reference(x, params)
    assert out.shape == (batch, 2), out.shape
    assert jnp.allclose(out, ref, atol=1e-5, rtol=1e-5), "f32 mismatch vs reference"

    # Non-multiple batch exercising multi-step grid + ragged last block (no padding pass).
    x2 = jax.random.normal(k_x2, (300, input_dim), dtype=jnp.float32)
    out2 = jax.block_until_ready(nkn_forward(x2, params))
    ref2 = nkn_reference(x2, params)
    assert out2.shape == (300, 2), out2.shape
    assert jnp.allclose(out2, ref2, atol=1e-5, rtol=1e-5), "tiled f32 mismatch vs reference"

    # bf16 matmul-operand path (x cast inside the kernel, f32 accumulate).
    out_bf16 = jax.block_until_ready(
        nkn_forward(x, params, matmul_dtype=jnp.bfloat16))
    assert out_bf16.shape == (batch, 2), out_bf16.shape
    assert jnp.allclose(out_bf16, ref, atol=2e-2, rtol=2e-2), "bf16 mismatch vs reference"

    print("KERNEL_OK")
</pallas_src>

<mosaic_0001>
module attributes {stable_mosaic.version = 11 : i64} {
  func.func @nkn_kernel(%arg0: i32, %arg1: memref<8x16xf32, #tpu.memory_space<vmem>>, %arg2: memref<32x16xf32, #tpu.memory_space<vmem>>, %arg3: memref<32x1xf32, #tpu.memory_space<vmem>>, %arg4: memref<32x32xf32, #tpu.memory_space<vmem>>, %arg5: memref<32x1xf32, #tpu.memory_space<vmem>>, %arg6: memref<8x32xf32, #tpu.memory_space<vmem>>, %arg7: memref<8x1xf32, #tpu.memory_space<vmem>>, %arg8: memref<8x8xf32, #tpu.memory_space<vmem>>) attributes {dimension_semantics = [#tpu.dimension_semantics<parallel>], iteration_bounds = array<i64: 1>, scalar_prefetch = 0 : i64, scratch_operands = 0 : i64, tpu.core_type = #tpu.core_type<tc>, window_params = [{transform_indices = @transform_0, window_bounds = array<i64: 8, 16>}, {pipeline_mode = #tpu.pipeline_mode<synchronous>, transform_indices = @transform_1, window_bounds = array<i64: 32, 16>}, {pipeline_mode = #tpu.pipeline_mode<synchronous>, transform_indices = @transform_2, window_bounds = array<i64: 32, 1>}, {pipeline_mode = #tpu.pipeline_mode<synchronous>, transform_indices = @transform_3, window_bounds = array<i64: 32, 32>}, {pipeline_mode = #tpu.pipeline_mode<synchronous>, transform_indices = @transform_4, window_bounds = array<i64: 32, 1>}, {pipeline_mode = #tpu.pipeline_mode<synchronous>, transform_indices = @transform_5, window_bounds = array<i64: 8, 32>}, {pipeline_mode = #tpu.pipeline_mode<synchronous>, transform_indices = @transform_6, window_bounds = array<i64: 8, 1>}, {transform_indices = @transform_7, window_bounds = array<i64: 8, 8>}]} {
    %c0 = arith.constant 0 : index
    %c0_0 = arith.constant 0 : index
    %0 = vector.load %arg1[%c0, %c0_0] : memref<8x16xf32, #tpu.memory_space<vmem>>, vector<8x16xf32>
    %c0_1 = arith.constant 0 : index
    %c0_2 = arith.constant 0 : index
    %1 = vector.load %arg2[%c0_1, %c0_2] : memref<32x16xf32, #tpu.memory_space<vmem>>, vector<32x16xf32>
    %cst = arith.constant dense<0.000000e+00> : vector<32x8xf32>
    %2 = tpu.matmul %1, %0, %cst {dimension_numbers = #tpu.dot_dimension_numbers<[1], [1], [0], [0], [0, 0, 1, 0], [], []>} : vector<32x16xf32>, vector<8x16xf32>, vector<32x8xf32> -> vector<32x8xf32>
    %c0_3 = arith.constant 0 : index
    %c0_4 = arith.constant 0 : index
    %3 = vector.load %arg3[%c0_3, %c0_4] : memref<32x1xf32, #tpu.memory_space<vmem>>, vector<32x1xf32>
    %4 = vector.broadcast %3 : vector<32x1xf32> to vector<32x8xf32>
    %5 = arith.addf %2, %4 : vector<32x8xf32>
    %cst_5 = arith.constant 0.000000e+00 : f32
    %6 = vector.broadcast %cst_5 : f32 to vector<32x8xf32>
    %7 = arith.maximumf %5, %6 : vector<32x8xf32>
    %c0_6 = arith.constant 0 : index
    %c0_7 = arith.constant 0 : index
    %8 = vector.load %arg4[%c0_6, %c0_7] : memref<32x32xf32, #tpu.memory_space<vmem>>, vector<32x32xf32>
    %cst_8 = arith.constant dense<0.000000e+00> : vector<32x8xf32>
    %9 = tpu.matmul %8, %7, %cst_8 {dimension_numbers = #tpu.dot_dimension_numbers<[1], [0], [0], [1], [0, 0, 1, 1], [], []>} : vector<32x32xf32>, vector<32x8xf32>, vector<32x8xf32> -> vector<32x8xf32>
    %c0_9 = arith.constant 0 : index
    %c0_10 = arith.constant 0 : index
    %10 = vector.load %arg5[%c0_9, %c0_10] : memref<32x1xf32, #tpu.memory_space<vmem>>, vector<32x1xf32>
    %11 = vector.broadcast %10 : vector<32x1xf32> to vector<32x8xf32>
    %12 = arith.addf %9, %11 : vector<32x8xf32>
    %13 = math.sin %12 : vector<32x8xf32>
    %c0_11 = arith.constant 0 : index
    %c0_12 = arith.constant 0 : index
    %14 = vector.load %arg6[%c0_11, %c0_12] : memref<8x32xf32, #tpu.memory_space<vmem>>, vector<8x32xf32>
    %cst_13 = arith.constant dense<0.000000e+00> : vector<8x8xf32>
    %15 = tpu.matmul %14, %13, %cst_13 {dimension_numbers = #tpu.dot_dimension_numbers<[1], [0], [0], [1], [0, 0, 1, 1], [], []>} : vector<8x32xf32>, vector<32x8xf32>, vector<8x8xf32> -> vector<8x8xf32>
    %c0_14 = arith.constant 0 : index
    %c0_15 = arith.constant 0 : index
    %16 = vector.load %arg7[%c0_14, %c0_15] : memref<8x1xf32, #tpu.memory_space<vmem>>, vector<8x1xf32>
    %17 = vector.broadcast %16 : vector<8x1xf32> to vector<8x8xf32>
    %18 = arith.addf %15, %17 : vector<8x8xf32>
    %c0_16 = arith.constant 0 : index
    %c0_17 = arith.constant 0 : index
    %19 = vector.load %arg8[%c0_16, %c0_17] : memref<8x8xf32, #tpu.memory_space<vmem>>, vector<8x8xf32>
    tpu.vector_store %arg8[%c0_16, %c0_17], %18 {strides = array<i32>} : memref<8x8xf32, #tpu.memory_space<vmem>>, vector<8x8xf32>,
    return
  }
  func.func @transform_0(%arg0: i32) -> (i32, i32) {
    %c0_i32 = arith.constant 0 : i32
    %c0_i32_0 = arith.constant 0 : i32
    return %arg0, %c0_i32 : i32, i32
  }
  func.func @transform_1(%arg0: i32) -> (i32, i32) {
    %c0_i32 = arith.constant 0 : i32
    %c0_i32_0 = arith.constant 0 : i32
    %c0_i32_1 = arith.constant 0 : i32
    return %c0_i32, %c0_i32_0 : i32, i32
  }
  func.func @transform_2(%arg0: i32) -> (i32, i32) {
    %c0_i32 = arith.constant 0 : i32
    %c0_i32_0 = arith.constant 0 : i32
    %c0_i32_1 = arith.constant 0 : i32
    return %c0_i32, %c0_i32_0 : i32, i32
  }
  func.func @transform_3(%arg0: i32) -> (i32, i32) {
    %c0_i32 = arith.constant 0 : i32
    %c0_i32_0 = arith.constant 0 : i32
    %c0_i32_1 = arith.constant 0 : i32
    return %c0_i32, %c0_i32_0 : i32, i32
  }
  func.func @transform_4(%arg0: i32) -> (i32, i32) {
    %c0_i32 = arith.constant 0 : i32
    %c0_i32_0 = arith.constant 0 : i32
    %c0_i32_1 = arith.constant 0 : i32
    return %c0_i32, %c0_i32_0 : i32, i32
  }
  func.func @transform_5(%arg0: i32) -> (i32, i32) {
    %c0_i32 = arith.constant 0 : i32
    %c0_i32_0 = arith.constant 0 : i32
    %c0_i32_1 = arith.constant 0 : i32
    return %c0_i32, %c0_i32_0 : i32, i32
  }
  func.func @transform_6(%arg0: i32) -> (i32, i32) {
    %c0_i32 = arith.constant 0 : i32
    %c0_i32_0 = arith.constant 0 : i32
    %c0_i32_1 = arith.constant 0 : i32
    return %c0_i32, %c0_i32_0 : i32, i32
  }
  func.func @transform_7(%arg0: i32) -> (i32, i32) {
    %c0_i32 = arith.constant 0 : i32
    %c0_i32_0 = arith.constant 0 : i32
    return %c0_i32, %arg0 : i32, i32
  }
}

</mosaic_0001>

<llo_original>
// kernel: tpu_custom_call.1
$region0: #{tpu_custom_call.1}
  #allocation0 [shape = 'u32[]', space=smem, size = 0x4, offset = 0x4, fixed_abs, tag = 'smem constant byte address 0x4 - core index']
  #allocation1 [shape = 'u32[144,128]{1,0:T(1,128)}', space=vmem, size = 0x12000, scoped, tag = 'internal scratch']
  %s0 = inlined_call_operand.vmem [shape: f32[8,16], index: 0, kind: input, shape index: {}]
  %s1 = inlined_call_operand.vmem [shape: f32[32,16], index: 1, kind: input, shape index: {}]
  %s2 = inlined_call_operand.vmem [shape: f32[32,1], index: 2, kind: input, shape index: {}]
  %s3 = inlined_call_operand.vmem [shape: f32[32,32], index: 3, kind: input, shape index: {}]
  %s4 = inlined_call_operand.vmem [shape: f32[32,1], index: 4, kind: input, shape index: {}]
  %s5 = inlined_call_operand.vmem [shape: f32[8,32], index: 5, kind: input, shape index: {}]
  %s6 = inlined_call_operand.vmem [shape: f32[8,1], index: 6, kind: input, shape index: {}]
  %s7 = inlined_call_operand.hbm [shape: f32[8,8], index: 7, kind: output, shape index: {}]
  %s8 = sld [smem:[#allocation0]]
  $region38: #{tpu_custom_call.1} parent=0
    _
  %s10 = ssub.s32 1, %s8
  %s11 = scalar_select 0, %s10, %s8
  $region1: #{tpu_custom_call.1} parent=0
    #allocation2 [shape = 'u8[4096]{0}', space=vmem, size = 0x1000, scoped, tag = 'output window, operand 0, single buffered']
    #allocation3 [shape = 's32[1]{0}', space=sflag, size = 0x4, scoped, tag = 'scoped memory for tpu_custom_call.1']
    %12 = vsyncpa [#allocation3], 0
    // Predicated region
    $region2: #{tpu_custom_call.1} parent=1 // pred_check
      _
    $region3: #{tpu_custom_call.1} parent=1 // pred_check_branch
      %14 = sbr.rel (0) target = $region5
    $region4: #{tpu_custom_call.1} parent=1 // pred_region
      _
    $region5: #{tpu_custom_call.1} parent=1 // pred_fallthru
      _
    // Predicated region
    $region6: #{tpu_custom_call.1} parent=1 // pred_check
      _
    $region7: #{tpu_custom_call.1} parent=1 // pred_check_branch
      %16 = sbr.rel (0) target = $region9
    $region8: #{tpu_custom_call.1} parent=1 // pred_region
      _
    $region9: #{tpu_custom_call.1} parent=1 // pred_fallthru
      _
    // Predicated region
    $region10: #{tpu_custom_call.1} parent=1 // pred_check
      _
    $region11: #{tpu_custom_call.1} parent=1 // pred_check_branch
      %18 = sbr.rel (0) target = $region13
    $region12: #{tpu_custom_call.1} parent=1 // pred_region
      _
    $region13: #{tpu_custom_call.1} parent=1 // pred_fallthru
      _
    // Predicated region
    $region14: #{tpu_custom_call.1} parent=1 // pred_check
      _
    $region15: #{tpu_custom_call.1} parent=1 // pred_check_branch
      %20 = sbr.rel (0) target = $region17
    $region16: #{tpu_custom_call.1} parent=1 // pred_region
      _
    $region17: #{tpu_custom_call.1} parent=1 // pred_fallthru
      _
    // Predicated region
    $region18: #{tpu_custom_call.1} parent=1 // pred_check
      _
    $region19: #{tpu_custom_call.1} parent=1 // pred_check_branch
      %22 = sbr.rel (0) target = $region21
    $region20: #{tpu_custom_call.1} parent=1 // pred_region
      _
    $region21: #{tpu_custom_call.1} parent=1 // pred_fallthru
      _
    // Predicated region
    $region22: #{tpu_custom_call.1} parent=1 // pred_check
      _
    $region23: #{tpu_custom_call.1} parent=1 // pred_check_branch
      %24 = sbr.rel (0) target = $region25
    $region24: #{tpu_custom_call.1} parent=1 // pred_region
      _
    $region25: #{tpu_custom_call.1} parent=1 // pred_fallthru
      _
    // Predicated region
    $region26: #{tpu_custom_call.1} parent=1 // pred_check
      _
    $region27: #{tpu_custom_call.1} parent=1 // pred_check_branch
      %26 = sbr.rel (0) target = $region29
    $region28: #{tpu_custom_call.1} parent=1 // pred_region
      _
    $region29: #{tpu_custom_call.1} parent=1 // pred_fallthru
      _
    %v27 = vld [vmem:[%s0] sm:$0xff]
    %v28 = vld [vmem:[%s1] sm:$0xff]
    %v29 = vld [vmem:[%s1 + $0x8] sm:$0xff]
    %v30 = vld [vmem:[%s1 + $0x10] sm:$0xff]
    %v31 = vld [vmem:[%s1 + $0x18] sm:$0xff]
    %v32 = vld [vmem:[%s2] sm:$0xff]
    %v33 = vld [vmem:[%s2 + $0x8] sm:$0xff]
    %v34 = vld [vmem:[%s2 + $0x10] sm:$0xff]
    %v35 = vld [vmem:[%s2 + $0x18] sm:$0xff]
    %37 = vset.pattern.permute.xlu0 0
    %38 = vperm.xlu0 %37, %v32
    %v39 = vpop.permute.xlu0 %38
    %42 = vset.pattern.permute.xlu0 0
    %43 = vperm.xlu0 %42, %v33
    %v44 = vpop.permute.xlu0 %43
    %47 = vset.pattern.permute.xlu0 0
    %48 = vperm.xlu0 %47, %v34
    %v49 = vpop.permute.xlu0 %48
    %52 = vset.pattern.permute.xlu0 0
    %53 = vperm.xlu0 %52, %v35
    %v54 = vpop.permute.xlu0 %53
    %vm56 = vcmask 130048
    %v58 = vsel %vm56, %v28, 0
    %v61 = vsel %vm56, %v29, 0
    %v64 = vsel %vm56, %v30, 0
    %v67 = vsel %vm56, %v31, 0
    %v70 = vsel %vm56, %v27, 0
    %72 = vmatprep.subr.mxu0 0.0
    %73 = vmatpush1.xpose.msra.mxu0 %v70
    %74 = vmatprep.subr.mxu0 0.0
    %75 = vmatpush1.xpose.msra.mxu0 0.0
    %76 = vmatprep.subr.mxu0 0.0
    %77 = vmatpush1.xpose.msra.mxu0 0.0
    %78 = vmatprep.subr.mxu0 0.0
    %79 = vmatpush1.xpose.msra.mxu0 0.0
    %80 = vmatprep.subr.mxu0 0.0
    %81 = vmatpush1.xpose.msra.mxu0 0.0
    %82 = vmatprep.subr.mxu0 0.0
    %83 = vmatpush1.xpose.msra.mxu0 0.0
    %84 = vmatprep.subr.mxu0 0.0
    %85 = vmatpush1.xpose.msra.mxu0 0.0
    %86 = vmatprep.subr.mxu0 0.0
    %87 = vmatpush1.xpose.msra.mxu0 0.0
    %88 = vmatprep.subr.mxu0 0.0
    %89 = vmatpush1.xpose.msra.mxu0 0.0
    %90 = vmatprep.subr.mxu0 0.0
    %91 = vmatpush1.xpose.msra.mxu0 0.0
    %92 = vmatprep.subr.mxu0 0.0
    %93 = vmatpush1.xpose.msra.mxu0 0.0
    %94 = vmatprep.subr.mxu0 0.0
    %95 = vmatpush1.xpose.msra.mxu0 0.0
    %96 = vmatprep.subr.mxu0 0.0
    %97 = vmatpush1.xpose.msra.mxu0 0.0
    %98 = vmatprep.subr.mxu0 0.0
    %99 = vmatpush1.xpose.msra.mxu0 0.0
    %100 = vmatprep.subr.mxu0 0.0
    %101 = vmatpush1.xpose.msra.mxu0 0.0
    %102 = vmatprep.subr.mxu0 0.0
    %103 = vmatpush1.xpose.msra.mxu0 0.0
    %104 = vmatprep.subr.mxu0 0.0
    %105 = vmatpush1.xpose.msra.mxu0 0.0
    %106 = vmatprep.subr.mxu0 0.0
    %107 = vmatpush1.xpose.msra.mxu0 0.0
    %108 = vmatprep.subr.mxu0 0.0
    %109 = vmatpush1.xpose.msra.mxu0 0.0
    %110 = vmatprep.subr.mxu0 0.0
    %111 = vmatpush1.xpose.msra.mxu0 0.0
    %112 = vmatprep.subr.mxu0 0.0
    %113 = vmatpush1.xpose.msra.mxu0 0.0
    %114 = vmatprep.subr.mxu0 0.0
    %115 = vmatpush1.xpose.msra.mxu0 0.0
    %116 = vmatprep.subr.mxu0 0.0
    %117 = vmatpush1.xpose.msra.mxu0 0.0
    %118 = vmatprep.subr.mxu0 0.0
    %119 = vmatpush1.xpose.msra.mxu0 0.0
    %120 = vmatprep.subr.mxu0 0.0
    %121 = vmatpush1.xpose.msra.mxu0 0.0
    %122 = vmatprep.subr.mxu0 0.0
    %123 = vmatpush1.xpose.msra.mxu0 0.0
    %124 = vmatprep.subr.mxu0 0.0
    %125 = vmatpush1.xpose.msra.mxu0 0.0
    %126 = vmatprep.subr.mxu0 0.0
    %127 = vmatpush1.xpose.msra.mxu0 0.0
    %128 = vmatprep.subr.mxu0 0.0
    %129 = vmatpush1.xpose.msra.mxu0 0.0
    %130 = vmatprep.subr.mxu0 0.0
    %131 = vmatpush1.xpose.msra.mxu0 0.0
    %132 = vmatprep.subr.mxu0 0.0
    %133 = vmatpush1.xpose.msra.mxu0 0.0
    %134 = vmatprep.subr.mxu0 0.0
    %135 = vmatpush1.xpose.msra.mxu0 0.0
    %136 = vmatprep.mubr.f32.mxu0 0.0
    %137 = vmatmul.mubr.f32.gmra.mrb[0].mxu0 %v58
    %v138 = vpop.f32.mrb[0].mxu0
    %v139 = vadd.f32 %v39, %v138
    %v140 = vpop.f32.mrb[0].mxu0
    %141 = vmatprep.mubr.f32.mxu0 0.0
    %142 = vmatmul.mubr.f32.gmra.mrb[0].mxu0 %v61
    %v143 = vpop.f32.mrb[0].mxu0
    %v144 = vadd.f32 %v44, %v143
    %v145 = vpop.f32.mrb[0].mxu0
    %146 = vmatprep.mubr.f32.mxu0 0.0
    %147 = vmatmul.mubr.f32.gmra.mrb[0].mxu0 %v64
    %v148 = vpop.f32.mrb[0].mxu0
    %v149 = vadd.f32 %v49, %v148
    %v150 = vpop.f32.mrb[0].mxu0
    %151 = vmatprep.mubr.f32.mxu0 0.0
    %152 = vmatmul.mubr.f32.gmra.mrb[0].mxu0 %v67
    %v153 = vpop.f32.mrb[0].mxu0
    %v154 = vadd.f32 %v54, %v153
    %v155 = vpop.f32.mrb[0].mxu0
    %156 = vdwg.mxu0
    %v157 = vmax.f32 %v139, 0.0
    %v158 = vmax.f32 %v144, 0.0
    %v159 = vmax.f32 %v149, 0.0
    %v160 = vmax.f32 %v154, 0.0
    %v161 = vld [vmem:[%s3] sm:$0xff]
    %v162 = vld [vmem:[%s3 + $0x8] sm:$0xff]
    %v163 = vld [vmem:[%s3 + $0x10] sm:$0xff]
    %v164 = vld [vmem:[%s3 + $0x18] sm:$0xff]
    %v165 = vld [vmem:[%s4] sm:$0xff]
    %v166 = vld [vmem:[%s4 + $0x8] sm:$0xff]
    %v167 = vld [vmem:[%s4 + $0x10] sm:$0xff]
    %v168 = vld [vmem:[%s4 + $0x18] sm:$0xff]
    %170 = vset.pattern.permute.xlu0 0
    %171 = vperm.xlu0 %170, %v165
    %v172 = vpop.permute.xlu0 %171
    %175 = vset.pattern.permute.xlu0 0
    %176 = vperm.xlu0 %175, %v166
    %v177 = vpop.permute.xlu0 %176
    %180 = vset.pattern.permute.xlu0 0
    %181 = vperm.xlu0 %180, %v167
    %v182 = vpop.permute.xlu0 %181
    %185 = vset.pattern.permute.xlu0 0
    %186 = vperm.xlu0 %185, %v168
    %v187 = vpop.permute.xlu0 %186
    %vm189 = vcmask 261120
    %v191 = vsel %vm189, %v161, 0
    %v194 = vsel %vm189, %v162, 0
    %v197 = vsel %vm189, %v163, 0
    %v200 = vsel %vm189, %v164, 0
    %202 = vmatprep.subr.mxu0 0.0
    %203 = vmatpush1.msra.mxu0 %v157
    %204 = vmatprep.subr.mxu0 0.0
    %205 = vmatpush1.msra.mxu0 %v158
    %206 = vmatprep.subr.mxu0 0.0
    %207 = vmatpush1.msra.mxu0 %v159
    %208 = vmatprep.subr.mxu0 0.0
    %209 = vmatpush1.msra.mxu0 %v160
    %210 = vmatprep.subr.mxu0 0.0
    %211 = vmatpush1.msra.mxu0 0.0
    %212 = vmatprep.subr.mxu0 0.0
    %213 = vmatpush1.msra.mxu0 0.0
    %214 = vmatprep.subr.mxu0 0.0
    %215 = vmatpush1.msra.mxu0 0.0
    %216 = vmatprep.subr.mxu0 0.0
    %217 = vmatpush1.msra.mxu0 0.0
    %218 = vmatprep.subr.mxu0 0.0
    %219 = vmatpush1.msra.mxu0 0.0
    %220 = vmatprep.subr.mxu0 0.0
    %221 = vmatpush1.msra.mxu0 0.0
    %222 = vmatprep.subr.mxu0 0.0
    %223 = vmatpush1.msra.mxu0 0.0
    %224 = vmatprep.subr.mxu0 0.0
    %225 = vmatpush1.msra.mxu0 0.0
    %226 = vmatprep.subr.mxu0 0.0
    %227 = vmatpush1.msra.mxu0 0.0
    %228 = vmatprep.subr.mxu0 0.0
    %229 = vmatpush1.msra.mxu0 0.0
    %230 = vmatprep.subr.mxu0 0.0
    %231 = vmatpush1.msra.mxu0 0.0
    %232 = vmatprep.subr.mxu0 0.0
    %233 = vmatpush1.msra.mxu0 0.0
    %234 = vmatprep.subr.mxu0 0.0
    %235 = vmatpush1.msra.mxu0 0.0
    %236 = vmatprep.subr.mxu0 0.0
    %237 = vmatpush1.msra.mxu0 0.0
    %238 = vmatprep.subr.mxu0 0.0
    %239 = vmatpush1.msra.mxu0 0.0
    %240 = vmatprep.subr.mxu0 0.0
    %241 = vmatpush1.msra.mxu0 0.0
    %242 = vmatprep.subr.mxu0 0.0
    %243 = vmatpush1.msra.mxu0 0.0
    %244 = vmatprep.subr.mxu0 0.0
    %245 = vmatpush1.msra.mxu0 0.0
    %246 = vmatprep.subr.mxu0 0.0
    %247 = vmatpush1.msra.mxu0 0.0
    %248 = vmatprep.subr.mxu0 0.0
    %249 = vmatpush1.msra.mxu0 0.0
    %250 = vmatprep.subr.mxu0 0.0
    %251 = vmatpush1.msra.mxu0 0.0
    %252 = vmatprep.subr.mxu0 0.0
    %253 = vmatpush1.msra.mxu0 0.0
    %254 = vmatprep.subr.mxu0 0.0
    %255 = vmatpush1.msra.mxu0 0.0
    %256 = vmatprep.subr.mxu0 0.0
    %257 = vmatpush1.msra.mxu0 0.0
    %258 = vmatprep.subr.mxu0 0.0
    %259 = vmatpush1.msra.mxu0 0.0
    %260 = vmatprep.subr.mxu0 0.0
    %261 = vmatpush1.msra.mxu0 0.0
    %262 = vmatprep.subr.mxu0 0.0
    %263 = vmatpush1.msra.mxu0 0.0
    %264 = vmatprep.subr.mxu0 0.0
    %265 = vmatpush1.msra.mxu0 0.0
    %266 = vmatprep.mubr.f32.mxu0 0.0
    %267 = vmatmul.mubr.f32.gmra.mrb[0].mxu0 %v191
    %v268 = vpop.f32.mrb[0].mxu0
    %v269 = vadd.f32 %v172, %v268
    %v270 = vpop.f32.mrb[0].mxu0
    %271 = vmatprep.mubr.f32.mxu0 0.0
    %272 = vmatmul.mubr.f32.gmra.mrb[0].mxu0 %v194
    %v273 = vpop.f32.mrb[0].mxu0
    %v274 = vadd.f32 %v177, %v273
    %v275 = vpop.f32.mrb[0].mxu0
    %276 = vmatprep.mubr.f32.mxu0 0.0
    %277 = vmatmul.mubr.f32.gmra.mrb[0].mxu0 %v197
    %v278 = vpop.f32.mrb[0].mxu0
    %v279 = vadd.f32 %v182, %v278
    %v280 = vpop.f32.mrb[0].mxu0
    %281 = vmatprep.mubr.f32.mxu0 0.0
    %282 = vmatmul.mubr.f32.gmra.mrb[0].mxu0 %v200
    %v283 = vpop.f32.mrb[0].mxu0
    %v284 = vadd.f32 %v187, %v283
    %v285 = vpop.f32.mrb[0].mxu0
    %286 = vdwg.mxu0
    %v287 = vand.u32 2147483647, %v269
    %vm288 = vcmp.le.f32.partialorder %v287, 0.7853982
    %vm289 = vcmp.lt.s32.totalorder %v269, 0
    %v290 = vand.u32 %v269, 2139095040
    %v291 = vshrl.u32 %v290, 23
    %v292 = vsub.s32 %v291, 127
    %v293 = vand.u32 2147483647, %v269
    %v294 = vand.u32 %v293, 8388607
    %v295 = vor.u32 %v294, 8388608
    %v296 = vsub.s32 0, %v295
    %v297 = vadd.s32 %v292, 1
    %vm298 = vcmp.gt.s32.totalorder %v297, 0
    %v299 = vsel %vm298, %v297, 0
    %v300 = vshrl.u32 %v299, 5
    %v301 = vand.u32 %v299, 31
    %v302 = vsub.s32 32, %v301
    %v303 = vshrl.u32 683565275, %v302
    %v304 = vshll.u32 683565275, %v301
    %v305 = vshrl.u32 2475754826, %v302
    %v306 = vor.u32 %v304, %v305
    %v307 = vshll.u32 2475754826, %v301
    %v308 = vshrl.u32 2131351028, %v302
    %v309 = vor.u32 %v307, %v308
    %v310 = vshll.u32 2131351028, %v301
    %v311 = vshrl.u32 2102212464, %v302
    %v312 = vor.u32 %v310, %v311
    %v313 = vshll.u32 2102212464, %v301
    %v314 = vshrl.u32 920167782, %v302
    %v315 = vor.u32 %v313, %v314
    %v316 = vshll.u32 920167782, %v301
    %v317 = vshrl.u32 1326507024, %v302
    %v318 = vor.u32 %v316, %v317
    %vm319 = vcmp.lt.s32.totalorder %v300, 1
    %vm320 = vcmp.lt.s32.totalorder %v300, 2
    %vm321 = vcmp.lt.s32.totalorder %v300, 3
    %vm322 = vcmp.lt.s32.totalorder %v300, 4
    %v323 = vsel %vm319, %v303, %v306
    %v324 = vsel %vm322, %v312, 2102212464
    %v325 = vsel %vm321, %v309, %v324
    %v326 = vsel %vm320, %v323, %v325
    %v327 = vsel %vm319, %v306, %v309
    %v328 = vsel %vm322, %v315, 920167782
    %v329 = vsel %vm321, %v312, %v328
    %v330 = vsel %vm320, %v327, %v329
    %v331 = vsel %vm319, %v309, %v312
    %v332 = vsel %vm322, %v318, 1326507024
    %v333 = vsel %vm321, %v315, %v332
    %v334 = vsel %vm320, %v331, %v333
    %v335 = vshll.u32 %v295, 8
    %v336 = vmul.u32.u64.compose %v335, %v334
    %v337 = vextract.low.u32 %v336
    %v338 = vextract.high.u32 %v336
    %v339 = vmul.u32.u64.compose %v335, %v330
    %v340 = vextract.low.u32 %v339
    %v341 = vextract.high.u32 %v339
    %v342 = vmul.u32 %v335, %v326
    %v343 = vadd.s32 %v338, %v340
    %vm344 = vc.u32 %v338, %v340
    %v345 = vadd.s32 %v341, 1
    %v346 = vsel %vm344, %v345, %v341
    %v347 = vadd.s32 %v342, %v346
    %v348 = vadd.s32 %v347, 536870912
    %v349 = vshrl.u32 %v348, 30
    %v350 = vshll.u32 %v349, 30
    %v351 = vsub.s32 %v347, %v350
    %vm352 = vcmp.lt.s32.totalorder %v351, 0
    %v353 = vsub.s32 0, %v351
    %v354 = vsel %vm352, %v353, %v351
    %v355 = vclz %v354
    %v356 = vsub.s32 %v355, 2
    %vm357 = vcmp.gt.s32.totalorder 0, %v356
    %v358 = vsel %vm357, 0, %v356
    %v359 = vsub.s32 32, %v358
    %v360 = vshll.u32 %v351, %v358
    %v361 = vshrl.u32 %v343, %v359
    %v362 = vor.u32 %v360, %v361
    %v363 = vsub.s32 4294967266, %v358
    %v364 = vadd.s32 %v363, 127
    %v365 = vshll.u32 %v364, 23
    %v366 = vor.u32 4788187, %v365
    %v367 = vand.u32 2147483647, %v366
    %v369 = vcvt.s32.f32 %v362
    %v370 = vmul.f32 %v369, %v367
    %v371 = vxor.u32 %v370, 2147483648
    %v372 = vsel %vm289, %v371, %v370
    %v373 = vsub.s32 4, %v349
    %v374 = vsel %vm289, %v373, %v349
    %v375 = vsel %vm288, %v269, %v372
    %v376 = vsel %vm288, 0, %v374
    %v377 = vcosq.f32.pop %v375
    %v378 = vsinq.f32.pop %v375
    %vm379 = vweird.f32 %v269
    %v380 = vadd.s32 %v376, 3
    %v381 = vand.u32 %v380, 3
    %vm382 = vcmp.lt.s32.totalorder %v381, 2
    %vm383 = vcmp.eq.s32.totalorder %v381, 0
    %v384 = vxor.u32 %v378, 2147483648
    %v385 = vsel %vm383, %v377, %v384
    %vm386 = vcmp.eq.s32.totalorder %v381, 2
    %v387 = vxor.u32 %v377, 2147483648
    %v388 = vsel %vm386, %v387, %v378
    %v389 = vsel %vm382, %v385, %v388
    %v390 = vsel %vm379, nan, %v389
    %v391 = vand.u32 2147483647, %v274
    %vm392 = vcmp.le.f32.partialorder %v391, 0.7853982
    %vm393 = vcmp.lt.s32.totalorder %v274, 0
    %v394 = vand.u32 %v274, 2139095040
    %v395 = vshrl.u32 %v394, 23
    %v396 = vsub.s32 %v395, 127
    %v397 = vand.u32 2147483647, %v274
    %v398 = vand.u32 %v397, 8388607
    %v399 = vor.u32 %v398, 8388608
    %v400 = vsub.s32 0, %v399
    %v401 = vadd.s32 %v396, 1
    %vm402 = vcmp.gt.s32.totalorder %v401, 0
    %v403 = vsel %vm402, %v401, 0
    %v404 = vshrl.u32 %v403, 5
    %v405 = vand.u32 %v403, 31
    %v406 = vsub.s32 32, %v405
    %v407 = vshrl.u32 683565275, %v406
    %v408 = vshll.u32 683565275, %v405
    %v409 = vshrl.u32 2475754826, %v406
    %v410 = vor.u32 %v408, %v409
    %v411 = vshll.u32 2475754826, %v405
    %v412 = vshrl.u32 2131351028, %v406
    %v413 = vor.u32 %v411, %v412
    %v414 = vshll.u32 2131351028, %v405
    %v415 = vshrl.u32 2102212464, %v406
    %v416 = vor.u32 %v414, %v415
    %v417 = vshll.u32 2102212464, %v405
    %v418 = vshrl.u32 920167782, %v406
    %v419 = vor.u32 %v417, %v418
    %v420 = vshll.u32 920167782, %v405
    %v421 = vshrl.u32 1326507024, %v406
    %v422 = vor.u32 %v420, %v421
    %vm423 = vcmp.lt.s32.totalorder %v404, 1
    %vm424 = vcmp.lt.s32.totalorder %v404, 2
    %vm425 = vcmp.lt.s32.totalorder %v404, 3
    %vm426 = vcmp.lt.s32.totalorder %v404, 4
    %v427 = vsel %vm423, %v407, %v410
    %v428 = vsel %vm426, %v416, 2102212464
    %v429 = vsel %vm425, %v413, %v428
    %v430 = vsel %vm424, %v427, %v429
    %v431 = vsel %vm423, %v410, %v413
    %v432 = vsel %vm426, %v419, 920167782
    %v433 = vsel %vm425, %v416, %v432
    %v434 = vsel %vm424, %v431, %v433
    %v435 = vsel %vm423, %v413, %v416
    %v436 = vsel %vm426, %v422, 1326507024
    %v437 = vsel %vm425, %v419, %v436
    %v438 = vsel %vm424, %v435, %v437
    %v439 = vshll.u32 %v399, 8
    %v440 = vmul.u32.u64.compose %v439, %v438
    %v441 = vextract.low.u32 %v440
    %v442 = vextract.high.u32 %v440
    %v443 = vmul.u32.u64.compose %v439, %v434
    %v444 = vextract.low.u32 %v443
    %v445 = vextract.high.u32 %v443
    %v446 = vmul.u32 %v439, %v430
    %v447 = vadd.s32 %v442, %v444
    %vm448 = vc.u32 %v442, %v444
    %v449 = vadd.s32 %v445, 1
    %v450 = vsel %vm448, %v449, %v445
    %v451 = vadd.s32 %v446, %v450
    %v452 = vadd.s32 %v451, 536870912
    %v453 = vshrl.u32 %v452, 30
    %v454 = vshll.u32 %v453, 30
    %v455 = vsub.s32 %v451, %v454
    %vm456 = vcmp.lt.s32.totalorder %v455, 0
    %v457 = vsub.s32 0, %v455
    %v458 = vsel %vm456, %v457, %v455
    %v459 = vclz %v458
    %v460 = vsub.s32 %v459, 2
    %vm461 = vcmp.gt.s32.totalorder 0, %v460
    %v462 = vsel %vm461, 0, %v460
    %v463 = vsub.s32 32, %v462
    %v464 = vshll.u32 %v455, %v462
    %v465 = vshrl.u32 %v447, %v463
    %v466 = vor.u32 %v464, %v465
    %v467 = vsub.s32 4294967266, %v462
    %v468 = vadd.s32 %v467, 127
    %v469 = vshll.u32 %v468, 23
    %v470 = vor.u32 4788187, %v469
    %v471 = vand.u32 2147483647, %v470
    %v473 = vcvt.s32.f32 %v466
    %v474 = vmul.f32 %v473, %v471
    %v475 = vxor.u32 %v474, 2147483648
    %v476 = vsel %vm393, %v475, %v474
    %v477 = vsub.s32 4, %v453
    %v478 = vsel %vm393, %v477, %v453
    %v479 = vsel %vm392, %v274, %v476
    %v480 = vsel %vm392, 0, %v478
    %v481 = vcosq.f32.pop %v479
    %v482 = vsinq.f32.pop %v479
    %vm483 = vweird.f32 %v274
    %v484 = vadd.s32 %v480, 3
    %v485 = vand.u32 %v484, 3
    %vm486 = vcmp.lt.s32.totalorder %v485, 2
    %vm487 = vcmp.eq.s32.totalorder %v485, 0
    %v488 = vxor.u32 %v482, 2147483648
    %v489 = vsel %vm487, %v481, %v488
    %vm490 = vcmp.eq.s32.totalorder %v485, 2
    %v491 = vxor.u32 %v481, 2147483648
    %v492 = vsel %vm490, %v491, %v482
    %v493 = vsel %vm486, %v489, %v492
    %v494 = vsel %vm483, nan, %v493
    %v495 = vand.u32 2147483647, %v279
    %vm496 = vcmp.le.f32.partialorder %v495, 0.7853982
    %vm497 = vcmp.lt.s32.totalorder %v279, 0
    %v498 = vand.u32 %v279, 2139095040
    %v499 = vshrl.u32 %v498, 23
    %v500 = vsub.s32 %v499, 127
    %v501 = vand.u32 2147483647, %v279
    %v502 = vand.u32 %v501, 8388607
    %v503 = vor.u32 %v502, 8388608
    %v504 = vsub.s32 0, %v503
    %v505 = vadd.s32 %v500, 1
    %vm506 = vcmp.gt.s32.totalorder %v505, 0
    %v507 = vsel %vm506, %v505, 0
    %v508 = vshrl.u32 %v507, 5
    %v509 = vand.u32 %v507, 31
    %v510 = vsub.s32 32, %v509
    %v511 = vshrl.u32 683565275, %v510
    %v512 = vshll.u32 683565275, %v509
    %v513 = vshrl.u32 2475754826, %v510
    %v514 = vor.u32 %v512, %v513
    %v515 = vshll.u32 2475754826, %v509
    %v516 = vshrl.u32 2131351028, %v510
    %v517 = vor.u32 %v515, %v516
    %v518 = vshll.u32 2131351028, %v509
    %v519 = vshrl.u32 2102212464, %v510
    %v520 = vor.u32 %v518, %v519
    %v521 = vshll.u32 2102212464, %v509
    %v522 = vshrl.u32 920167782, %v510
    %v523 = vor.u32 %v521, %v522
    %v524 = vshll.u32 920167782, %v509
    %v525 = vshrl.u32 1326507024, %v510
    %v526 = vor.u32 %v524, %v525
    %vm527 = vcmp.lt.s32.totalorder %v508, 1
    %vm528 = vcmp.lt.s32.totalorder %v508, 2
    %vm529 = vcmp.lt.s32.totalorder %v508, 3
    %vm530 = vcmp.lt.s32.totalorder %v508, 4
    %v531 = vsel %vm527, %v511, %v514
    %v532 = vsel %vm530, %v520, 2102212464
    %v533 = vsel %vm529, %v517, %v532
    %v534 = vsel %vm528, %v531, %v533
    %v535 = vsel %vm527, %v514, %v517
    %v536 = vsel %vm530, %v523, 920167782
    %v537 = vsel %vm529, %v520, %v536
    %v538 = vsel %vm528, %v535, %v537
    %v539 = vsel %vm527, %v517, %v520
    %v540 = vsel %vm530, %v526, 1326507024
    %v541 = vsel %vm529, %v523, %v540
    %v542 = vsel %vm528, %v539, %v541
    %v543 = vshll.u32 %v503, 8
    %v544 = vmul.u32.u64.compose %v543, %v542
    %v545 = vextract.low.u32 %v544
    %v546 = vextract.high.u32 %v544
    %v547 = vmul.u32.u64.compose %v543, %v538
    %v548 = vextract.low.u32 %v547
    %v549 = vextract.high.u32 %v547
    %v550 = vmul.u32 %v543, %v534
    %v551 = vadd.s32 %v546, %v548
    %vm552 = vc.u32 %v546, %v548
    %v553 = vadd.s32 %v549, 1
    %v554 = vsel %vm552, %v553, %v549
    %v555 = vadd.s32 %v550, %v554
    %v556 = vadd.s32 %v555, 536870912
    %v557 = vshrl.u32 %v556, 30
    %v558 = vshll.u32 %v557, 30
    %v559 = vsub.s32 %v555, %v558
    %vm560 = vcmp.lt.s32.totalorder %v559, 0
    %v561 = vsub.s32 0, %v559
    %v562 = vsel %vm560, %v561, %v559
    %v563 = vclz %v562
    %v564 = vsub.s32 %v563, 2
    %vm565 = vcmp.gt.s32.totalorder 0, %v564
    %v566 = vsel %vm565, 0, %v564
    %v567 = vsub.s32 32, %v566
    %v568 = vshll.u32 %v559, %v566
    %v569 = vshrl.u32 %v551, %v567
    %v570 = vor.u32 %v568, %v569
    %v571 = vsub.s32 4294967266, %v566
    %v572 = vadd.s32 %v571, 127
    %v573 = vshll.u32 %v572, 23
    %v574 = vor.u32 4788187, %v573
    %v575 = vand.u32 2147483647, %v574
    %v577 = vcvt.s32.f32 %v570
    %v578 = vmul.f32 %v577, %v575
    %v579 = vxor.u32 %v578, 2147483648
    %v580 = vsel %vm497, %v579, %v578
    %v581 = vsub.s32 4, %v557
    %v582 = vsel %vm497, %v581, %v557
    %v583 = vsel %vm496, %v279, %v580
    %v584 = vsel %vm496, 0, %v582
    %v585 = vcosq.f32.pop %v583
    %v586 = vsinq.f32.pop %v583
    %vm587 = vweird.f32 %v279
    %v588 = vadd.s32 %v584, 3
    %v589 = vand.u32 %v588, 3
    %vm590 = vcmp.lt.s32.totalorder %v589, 2
    %vm591 = vcmp.eq.s32.totalorder %v589, 0
    %v592 = vxor.u32 %v586, 2147483648
    %v593 = vsel %vm591, %v585, %v592
    %vm594 = vcmp.eq.s32.totalorder %v589, 2
    %v595 = vxor.u32 %v585, 2147483648
    %v596 = vsel %vm594, %v595, %v586
    %v597 = vsel %vm590, %v593, %v596
    %v598 = vsel %vm587, nan, %v597
    %v599 = vand.u32 2147483647, %v284
    %vm600 = vcmp.le.f32.partialorder %v599, 0.7853982
    %vm601 = vcmp.lt.s32.totalorder %v284, 0
    %v602 = vand.u32 %v284, 2139095040
    %v603 = vshrl.u32 %v602, 23
    %v604 = vsub.s32 %v603, 127
    %v605 = vand.u32 2147483647, %v284
    %v606 = vand.u32 %v605, 8388607
    %v607 = vor.u32 %v606, 8388608
    %v608 = vsub.s32 0, %v607
    %v609 = vadd.s32 %v604, 1
    %vm610 = vcmp.gt.s32.totalorder %v609, 0
    %v611 = vsel %vm610, %v609, 0
    %v612 = vshrl.u32 %v611, 5
    %v613 = vand.u32 %v611, 31
    %v614 = vsub.s32 32, %v613
    %v615 = vshrl.u32 683565275, %v614
    %v616 = vshll.u32 683565275, %v613
    %v617 = vshrl.u32 2475754826, %v614
    %v618 = vor.u32 %v616, %v617
    %v619 = vshll.u32 2475754826, %v613
    %v620 = vshrl.u32 2131351028, %v614
    %v621 = vor.u32 %v619, %v620
    %v622 = vshll.u32 2131351028, %v613
    %v623 = vshrl.u32 2102212464, %v614
    %v624 = vor.u32 %v622, %v623
    %v625 = vshll.u32 2102212464, %v613
    %v626 = vshrl.u32 920167782, %v614
    %v627 = vor.u32 %v625, %v626
    %v628 = vshll.u32 920167782, %v613
    %v629 = vshrl.u32 1326507024, %v614
    %v630 = vor.u32 %v628, %v629
    %vm631 = vcmp.lt.s32.totalorder %v612, 1
    %vm632 = vcmp.lt.s32.totalorder %v612, 2
    %vm633 = vcmp.lt.s32.totalorder %v612, 3
    %vm634 = vcmp.lt.s32.totalorder %v612, 4
    %v635 = vsel %vm631, %v615, %v618
    %v636 = vsel %vm634, %v624, 2102212464
    %v637 = vsel %vm633, %v621, %v636
    %v638 = vsel %vm632, %v635, %v637
    %v639 = vsel %vm631, %v618, %v621
    %v640 = vsel %vm634, %v627, 920167782
    %v641 = vsel %vm633, %v624, %v640
    %v642 = vsel %vm632, %v639, %v641
    %v643 = vsel %vm631, %v621, %v624
    %v644 = vsel %vm634, %v630, 1326507024
    %v645 = vsel %vm633, %v627, %v644
    %v646 = vsel %vm632, %v643, %v645
    %v647 = vshll.u32 %v607, 8
    %v648 = vmul.u32.u64.compose %v647, %v646
    %v649 = vextract.low.u32 %v648
    %v650 = vextract.high.u32 %v648
    %v651 = vmul.u32.u64.compose %v647, %v642
    %v652 = vextract.low.u32 %v651
    %v653 = vextract.high.u32 %v651
    %v654 = vmul.u32 %v647, %v638
    %v655 = vadd.s32 %v650, %v652
    %vm656 = vc.u32 %v650, %v652
    %v657 = vadd.s32 %v653, 1
    %v658 = vsel %vm656, %v657, %v653
    %v659 = vadd.s32 %v654, %v658
    %v660 = vadd.s32 %v659, 536870912
    %v661 = vshrl.u32 %v660, 30
    %v662 = vshll.u32 %v661, 30
    %v663 = vsub.s32 %v659, %v662
    %vm664 = vcmp.lt.s32.totalorder %v663, 0
    %v665 = vsub.s32 0, %v663
    %v666 = vsel %vm664, %v665, %v663
    %v667 = vclz %v666
    %v668 = vsub.s32 %v667, 2
    %vm669 = vcmp.gt.s32.totalorder 0, %v668
    %v670 = vsel %vm669, 0, %v668
    %v671 = vsub.s32 32, %v670
    %v672 = vshll.u32 %v663, %v670
    %v673 = vshrl.u32 %v655, %v671
    %v674 = vor.u32 %v672, %v673
    %v675 = vsub.s32 4294967266, %v670
    %v676 = vadd.s32 %v675, 127
    %v677 = vshll.u32 %v676, 23
    %v678 = vor.u32 4788187, %v677
    %v679 = vand.u32 2147483647, %v678
    %v681 = vcvt.s32.f32 %v674
    %v682 = vmul.f32 %v681, %v679
    %v683 = vxor.u32 %v682, 2147483648
    %v684 = vsel %vm601, %v683, %v682
    %v685 = vsub.s32 4, %v661
    %v686 = vsel %vm601, %v685, %v661
    %v687 = vsel %vm600, %v284, %v684
    %v688 = vsel %vm600, 0, %v686
    %v689 = vcosq.f32.pop %v687
    %v690 = vsinq.f32.pop %v687
    %vm691 = vweird.f32 %v284
    %v692 = vadd.s32 %v688, 3
    %v693 = vand.u32 %v692, 3
    %vm694 = vcmp.lt.s32.totalorder %v693, 2
    %vm695 = vcmp.eq.s32.totalorder %v693, 0
    %v696 = vxor.u32 %v690, 2147483648
    %v697 = vsel %vm695, %v689, %v696
    %vm698 = vcmp.eq.s32.totalorder %v693, 2
    %v699 = vxor.u32 %v689, 2147483648
    %v700 = vsel %vm698, %v699, %v690
    %v701 = vsel %vm694, %v697, %v700
    %v702 = vsel %vm691, nan, %v701
    %v703 = vld [vmem:[%s5] sm:$0xff]
    %v704 = vld [vmem:[%s6] sm:$0xff]
    %706 = vset.pattern.permute.xlu0 0
    %707 = vperm.xlu0 %706, %v704
    %v708 = vpop.permute.xlu0 %707
    %v711 = vsel %vm189, %v703, 0
    %713 = vmatprep.subr.mxu0 0.0
    %714 = vmatpush1.msra.mxu0 %v390
    %715 = vmatprep.subr.mxu0 0.0
    %716 = vmatpush1.msra.mxu0 %v494
    %717 = vmatprep.subr.mxu0 0.0
    %718 = vmatpush1.msra.mxu0 %v598
    %719 = vmatprep.subr.mxu0 0.0
    %720 = vmatpush1.msra.mxu0 %v702
    %721 = vmatprep.subr.mxu0 0.0
    %722 = vmatpush1.msra.mxu0 0.0
    %723 = vmatprep.subr.mxu0 0.0
    %724 = vmatpush1.msra.mxu0 0.0
    %725 = vmatprep.subr.mxu0 0.0
    %726 = vmatpush1.msra.mxu0 0.0
    %727 = vmatprep.subr.mxu0 0.0
    %728 = vmatpush1.msra.mxu0 0.0
    %729 = vmatprep.subr.mxu0 0.0
    %730 = vmatpush1.msra.mxu0 0.0
    %731 = vmatprep.subr.mxu0 0.0
    %732 = vmatpush1.msra.mxu0 0.0
    %733 = vmatprep.subr.mxu0 0.0
    %734 = vmatpush1.msra.mxu0 0.0
    %735 = vmatprep.subr.mxu0 0.0
    %736 = vmatpush1.msra.mxu0 0.0
    %737 = vmatprep.subr.mxu0 0.0
    %738 = vmatpush1.msra.mxu0 0.0
    %739 = vmatprep.subr.mxu0 0.0
    %740 = vmatpush1.msra.mxu0 0.0
    %741 = vmatprep.subr.mxu0 0.0
    %742 = vmatpush1.msra.mxu0 0.0
    %743 = vmatprep.subr.mxu0 0.0
    %744 = vmatpush1.msra.mxu0 0.0
    %745 = vmatprep.subr.mxu0 0.0
    %746 = vmatpush1.msra.mxu0 0.0
    %747 = vmatprep.subr.mxu0 0.0
    %748 = vmatpush1.msra.mxu0 0.0
    %749 = vmatprep.subr.mxu0 0.0
    %750 = vmatpush1.msra.mxu0 0.0
    %751 = vmatprep.subr.mxu0 0.0
    %752 = vmatpush1.msra.mxu0 0.0
    %753 = vmatprep.subr.mxu0 0.0
    %754 = vmatpush1.msra.mxu0 0.0
    %755 = vmatprep.subr.mxu0 0.0
    %756 = vmatpush1.msra.mxu0 0.0
    %757 = vmatprep.subr.mxu0 0.0
    %758 = vmatpush1.msra.mxu0 0.0
    %759 = vmatprep.subr.mxu0 0.0
    %760 = vmatpush1.msra.mxu0 0.0
    %761 = vmatprep.subr.mxu0 0.0
    %762 = vmatpush1.msra.mxu0 0.0
    %763 = vmatprep.subr.mxu0 0.0
    %764 = vmatpush1.msra.mxu0 0.0
    %765 = vmatprep.subr.mxu0 0.0
    %766 = vmatpush1.msra.mxu0 0.0
    %767 = vmatprep.subr.mxu0 0.0
    %768 = vmatpush1.msra.mxu0 0.0
    %769 = vmatprep.subr.mxu0 0.0
    %770 = vmatpush1.msra.mxu0 0.0
    %771 = vmatprep.subr.mxu0 0.0
    %772 = vmatpush1.msra.mxu0 0.0
    %773 = vmatprep.subr.mxu0 0.0
    %774 = vmatpush1.msra.mxu0 0.0
    %775 = vmatprep.subr.mxu0 0.0
    %776 = vmatpush1.msra.mxu0 0.0
    %777 = vmatprep.mubr.f32.mxu0 0.0
    %778 = vmatmul.mubr.f32.gmra.mrb[0].mxu0 %v711
    %v779 = vpop.f32.mrb[0].mxu0
    %v780 = vadd.f32 %v708, %v779
    %v781 = vpop.f32.mrb[0].mxu0
    %782 = vdwg.mxu0
    %vm783 = vcmask 64512
    %784 = vst.msk [vmem:[#allocation2] sm:$0xff] %vm783, %v780
    // Predicated region
    $region30: #{tpu_custom_call.1} parent=1 // pred_check
      _
    $region31: #{tpu_custom_call.1} parent=1 // pred_check_branch
      %786 = sbr.rel (0) target = $region33
    $region32: #{tpu_custom_call.1} parent=1 // pred_region
      %s788 = ssub.s32 128, 128
      %789 = vsyncadd [#allocation3], %s788
      %s791 = sshll.u32 [#allocation2], 4
      %s792 = int_to_ptr.vmem [resolvable:$true] %s791
      %794 = dma.vmem_to_hbm [thread:$0]  %s792, 128, %s7, [#allocation3]
    $region33: #{tpu_custom_call.1} parent=1 // pred_fallthru
      _
    // Predicated region
    $region34: #{tpu_custom_call.1} parent=1 // pred_check
      _
    $region35: #{tpu_custom_call.1} parent=1 // pred_check_branch
      %796 = sbr.rel (0) target = $region37
    $region36: #{tpu_custom_call.1} parent=1 // pred_region
      %797 = dma.done [#allocation3], 128
    $region37: #{tpu_custom_call.1} parent=1 // pred_fallthru
      _
    %798 = vsyncpa [#allocation3], 1

</llo_original>
